<compile_context>
chip_gen: v5e
topology: v5e:2x2
jax: 0.10.0
libtpu: 0.0.40
codegen_flags: <defaults>
</compile_context>

<pallas_src>
import functools

import jax
import jax.numpy as jnp
from jax.experimental import pallas as pl
from jax.experimental.pallas import tpu as pltpu


# ----------------------------------------------------------------------------
# Shared in-kernel helper: assemble the fused patch and do ONE matmul.
#   x_ref : (1, Hp, OW, KW*Cin)  bf16   (width / kernel-width taps pre-packed)
#   w_ref : (KH*KW*Cin, Cpad)    bf16
#   returns acc (Q, Cpad) f32 held in registers.
# ----------------------------------------------------------------------------
def _conv_tile(x_ref, w_ref, *, KH, TH, OW, stride):
    t = pl.program_id(1)
    row0 = pl.multiple_of(t * TH * stride, TH * stride)
    KWC = x_ref.shape[3]
    Q = TH * OW

    bands = []
    for kh in range(KH):
        if stride == 1:
            rows = x_ref[0, pl.ds(row0 + kh, TH), :, :]              # (TH, OW, KWC)
        else:
            rows = x_ref[0, pl.ds(row0 + kh, TH, stride), :, :]      # strided rows
        bands.append(rows.reshape(Q, KWC))
    patch = bands[0] if KH == 1 else jnp.concatenate(bands, axis=-1)  # (Q, KH*KWC)

    # single fused matmul, bf16 operands, f32 accumulation (registers)
    return jnp.dot(patch, w_ref[...], preferred_element_type=jnp.float32)


# ----------------------------------------------------------------------------
# Kernel 1: conv tile (registers only) -> per-tile BN partial statistics.
#   grid = (N, T), both axes "parallel"
#   psum_ref / psq_ref : (1, 1, 1, Cpad) f32
# ----------------------------------------------------------------------------
def conv_stats_kernel(x_ref, w_ref, psum_ref, psq_ref, *, KH, TH, OW, stride):
    acc = _conv_tile(x_ref, w_ref, KH=KH, TH=TH, OW=OW, stride=stride)  # (Q, Cpad)
    psum_ref[0, 0] = jnp.sum(acc, axis=0, keepdims=True)
    psq_ref[0, 0] = jnp.sum(acc * acc, axis=0, keepdims=True)


# ----------------------------------------------------------------------------
# Kernel 2: recompute conv tile, reduce BN stats in-kernel, fold BN, Mish, and
# write the channel-major lane-dense output block (no padded intermediate ever
# touches HBM).
#   grid = (N, T), both axes "parallel"
#   psum_ref / psq_ref : full (N, T, 1, Cpad) f32 (tiny, constant block index)
#   gamma_ref/beta_ref : (1, Cpad) f32
#   o_ref              : (1, Cout, TH*OW) f32
# ----------------------------------------------------------------------------
def conv_bn_mish_kernel(x_ref, w_ref, psum_ref, psq_ref, gamma_ref, beta_ref, o_ref,
                        *, KH, TH, OW, stride, inv_m, eps, cout):
    acc = _conv_tile(x_ref, w_ref, KH=KH, TH=TH, OW=OW, stride=stride)  # (Q, Cpad)
    cpad = acc.shape[1]

    # ---- BN statistics reduction + folding (tiny, done in-kernel: no XLA glue) ----
    ch_sum = jnp.sum(psum_ref[...].reshape(-1, cpad), axis=0, keepdims=True)
    ch_sq = jnp.sum(psq_ref[...].reshape(-1, cpad), axis=0, keepdims=True)
    mean = ch_sum * inv_m
    var = jnp.maximum(ch_sq * inv_m - mean * mean, 0.0)      # biased (training-mode BN)
    scale = gamma_ref[...] * jax.lax.rsqrt(var + eps)        # (1, Cpad)
    shift = beta_ref[...] - mean * scale                     # (1, Cpad)

    # ---- BN affine (cheap VPU, lane-broadcast), then slice to real channels ----
    z = acc * scale + shift                                  # (Q, Cpad)
    zc = jnp.transpose(z, (1, 0))[:cout, :]                  # (Cout, Q) channel-major

    # ---- Mish with a single exp (softplus threshold 20, as in PyTorch) ----
    e = jnp.exp(jnp.minimum(zc, 20.0))
    g = (1.0 + e) * (1.0 + e)
    tanh_sp = (g - 1.0) * pl.reciprocal(g + 1.0, approx=True)
    o_ref[0] = jnp.where(zc > 20.0, zc, zc * tanh_sp)


# ----------------------------------------------------------------------------
# Padding-aware VMEM size of one buffer (minor dim -> 128 lanes, 2nd-minor ->
# dtype sublane multiple).
# ----------------------------------------------------------------------------
def _padded_bytes(shape, dtype):
    it = jnp.dtype(dtype).itemsize
    sub = 8 * max(1, 4 // it)                    # f32: 8, bf16: 16, int8: 32
    dims = [int(d) for d in shape] or [1]
    if len(dims) == 1:
        dims = [1] + dims
    lead = 1
    for d in dims[:-2]:
        lead *= d
    s2 = -(-dims[-2] // sub) * sub
    s1 = -(-dims[-1] // 128) * 128
    return lead * s2 * s1 * it


# ----------------------------------------------------------------------------
# Row-tile selection: largest divisor of OH whose (padding-aware) footprint fits
# the budget; minor output dim kept a multiple of 128 (or the full image).
# ----------------------------------------------------------------------------
def _choose_row_tile(OH, OW, Hp, KWC, KKC, Cpad, Cout, N, budget):
    cands = [th for th in range(OH, 0, -1)
             if OH % th == 0 and (th == OH or (th * OW) % 128 == 0)]
    if not cands:
        cands = [OH]
    x_blk = _padded_bytes((Hp, OW, KWC), jnp.bfloat16)
    w_blk = _padded_bytes((KKC, Cpad), jnp.bfloat16)
    for th in cands:
        q = th * OW
        t_cnt = OH // th
        est = (2 * x_blk + 2 * w_blk
               + 2 * _padded_bytes((Cout, q), jnp.float32)             # out block x2
               + 6 * _padded_bytes((N * t_cnt, Cpad), jnp.float32)     # psum/psq
               + 4 * _padded_bytes((q, Cpad), jnp.float32)             # acc / z / zt
               + 2 * _padded_bytes((q, KKC), jnp.bfloat16))            # fused patch
        if est <= budget:
            return th
    return cands[-1]


# ----------------------------------------------------------------------------
# Wrapper (public API: NCHW in, NCHW out — matches the PyTorch module)
# ----------------------------------------------------------------------------
def convolutional_layer(x_nchw, weight_oihw, gamma, beta, *, stride, padding, eps=1e-5):
    N, Cin, H, W = x_nchw.shape
    Cout, Cin_w, KH, KW = weight_oihw.shape
    assert Cin_w == Cin
    s, p = stride, padding
    OH = (H + 2 * p - KH) // s + 1
    OW = (W + 2 * p - KW) // s + 1
    Hp, Wp = H + 2 * p, W + 2 * p
    KWC = KW * Cin
    KKC = KH * KWC
    Cpad = pl.cdiv(Cout, 128) * 128
    Qtot = OH * OW
    M = N * Qtot

    # --- light XLA glue: layout, spatial pad, width/kernel-width tap packing ---
    x_nhwc = jnp.transpose(x_nchw, (0, 2, 3, 1)).astype(jnp.float32)
    x_pad = jnp.pad(x_nhwc, ((0, 0), (p, p), (p, p), (0, 0)))
    cols = [x_pad[:, :, kw: kw + (OW - 1) * s + 1: s, :] for kw in range(KW)]
    x_packed = jnp.stack(cols, axis=3).reshape(N, Hp, OW, KWC).astype(jnp.bfloat16)

    # weight -> (KH, KW, Cin, Cout) -> (KKC, Cpad), matching the patch K ordering
    w = jnp.transpose(weight_oihw, (2, 3, 1, 0)).reshape(KKC, Cout)
    w = jnp.pad(w, ((0, 0), (0, Cpad - Cout))).astype(jnp.bfloat16)

    gamma2d = jnp.pad(gamma.astype(jnp.float32), (0, Cpad - Cout)).reshape(1, Cpad)
    beta2d = jnp.pad(beta.astype(jnp.float32), (0, Cpad - Cout)).reshape(1, Cpad)

    # --- generation-aware VMEM budget (padding-aware accounting below) ---
    try:
        vmem_cap = int(pltpu.get_tpu_info().vmem_capacity_bytes)
    except Exception:
        vmem_cap = 64 * 2 ** 20            # conservative (v7x-sized) fallback
    budget = (vmem_cap * 5) // 8           # ~40 MiB on v7x, ~80 MiB on v5e/v6e

    TH = _choose_row_tile(OH, OW, Hp, KWC, KKC, Cpad, Cout, N, budget)
    T = OH // TH
    Q = TH * OW

    x_spec = pl.BlockSpec((1, Hp, OW, KWC), lambda n, t: (n, 0, 0, 0))
    w_spec = pl.BlockSpec((KKC, Cpad), lambda n, t: (0, 0))

    # --- Pallas kernel 1: conv tile + per-tile BN partial stats (no y in HBM) ---
    k1 = functools.partial(conv_stats_kernel, KH=KH, TH=TH, OW=OW, stride=s)
    psum, psq = pl.pallas_call(
        k1,
        out_shape=(jax.ShapeDtypeStruct((N, T, 1, Cpad), jnp.float32),
                   jax.ShapeDtypeStruct((N, T, 1, Cpad), jnp.float32)),
        grid_spec=pltpu.PrefetchScalarGridSpec(
            num_scalar_prefetch=0,
            grid=(N, T),
            in_specs=[x_spec, w_spec],
            out_specs=[pl.BlockSpec((1, 1, 1, Cpad), lambda n, t: (n, t, 0, 0)),
                       pl.BlockSpec((1, 1, 1, Cpad), lambda n, t: (n, t, 0, 0))],
        ),
        compiler_params=pltpu.CompilerParams(
            dimension_semantics=("parallel", "parallel"),
            vmem_limit_bytes=int(budget)),
    )(x_packed, w)

    # --- Pallas kernel 2: recompute conv, fold BN in-kernel, Mish, channel-major ---
    k2 = functools.partial(conv_bn_mish_kernel, KH=KH, TH=TH, OW=OW, stride=s,
                           inv_m=1.0 / M, eps=float(eps), cout=Cout)
    out_ncq = pl.pallas_call(
        k2,
        out_shape=jax.ShapeDtypeStruct((N, Cout, Qtot), jnp.float32),
        grid_spec=pltpu.PrefetchScalarGridSpec(
            num_scalar_prefetch=0,
            grid=(N, T),
            in_specs=[x_spec, w_spec,
                      pl.BlockSpec((N, T, 1, Cpad), lambda n, t: (0, 0, 0, 0)),
                      pl.BlockSpec((N, T, 1, Cpad), lambda n, t: (0, 0, 0, 0)),
                      pl.BlockSpec((1, Cpad), lambda n, t: (0, 0)),
                      pl.BlockSpec((1, Cpad), lambda n, t: (0, 0))],
            out_specs=pl.BlockSpec((1, Cout, Q), lambda n, t: (n, 0, t)),
        ),
        compiler_params=pltpu.CompilerParams(
            dimension_semantics=("parallel", "parallel"),
            vmem_limit_bytes=int(budget)),
    )(x_packed, w, psum, psq, gamma2d, beta2d)

    # free reshape to NCHW (no transpose pass in XLA)
    return out_ncq.reshape(N, Cout, OH, OW)


# ----------------------------------------------------------------------------
# Pure-JAX reference. matmul_dtype=jnp.bfloat16 mirrors the kernel's intentional
# bf16 MXU operand quantization (f32 accumulation), allowing a tight check.
# ----------------------------------------------------------------------------
def reference(x_nchw, weight_oihw, gamma, beta, *, stride, padding, eps=1e-5,
              matmul_dtype=jnp.float32):
    xr = x_nchw.astype(matmul_dtype).astype(jnp.float32)
    wr = weight_oihw.astype(matmul_dtype).astype(jnp.float32)
    conv = jax.lax.conv_general_dilated(
        xr, wr, window_strides=(stride, stride),
        padding=[(padding, padding), (padding, padding)],
        dimension_numbers=("NCHW", "OIHW", "NCHW"))
    mean = conv.mean(axis=(0, 2, 3), keepdims=True)
    var = conv.var(axis=(0, 2, 3), keepdims=True)            # biased, as BN training
    z = gamma[None, :, None, None] * (conv - mean) / jnp.sqrt(var + eps) \
        + beta[None, :, None, None]
    sp = jnp.where(z > 20.0, z, jnp.log1p(jnp.exp(jnp.minimum(z, 20.0))))
    return z * jnp.tanh(sp)


if __name__ == "__main__":
    key = jax.random.PRNGKey(0)
    k1, k2 = jax.random.split(key)

    # small shapes consistent with ConvolutionalLayer(4, 8, 3, 1, 1)
    N, Cin, H, W = 2, 4, 16, 16
    Cout, KH, KW = 8, 3, 3
    stride, padding = 1, 1

    x = jax.random.normal(k1, (N, Cin, H, W), dtype=jnp.float32)
    fan_in = Cin * KH * KW
    weight = jax.random.normal(k2, (Cout, Cin, KH, KW), dtype=jnp.float32) \
             * (1.0 / jnp.sqrt(fan_in))
    gamma = jnp.linspace(0.5, 1.5, Cout, dtype=jnp.float32)   # BN weight
    beta = jnp.linspace(-0.2, 0.2, Cout, dtype=jnp.float32)   # BN bias

    out = convolutional_layer(x, weight, gamma, beta,
                              stride=stride, padding=padding)
    out = jax.block_until_ready(out)
    assert out.shape == (N, Cout, H, W)

    # check against a reference matching the kernel's bf16 MXU operands
    # (tolerance covers the single-exp Mish + approx-reciprocal reformulation)
    ref_bf16 = reference(x, weight, gamma, beta, stride=stride, padding=padding,
                         matmul_dtype=jnp.bfloat16)
    err_tight = float(jnp.max(jnp.abs(out - ref_bf16)))
    assert jnp.allclose(out, ref_bf16, atol=1e-2, rtol=1e-2), \
        f"max abs diff vs bf16-matched ref: {err_tight}"

    # loose sanity check against the full-f32 reference (bf16 quantization noise only)
    ref_f32 = reference(x, weight, gamma, beta, stride=stride, padding=padding)
    err_loose = float(jnp.max(jnp.abs(out - ref_f32)))
    assert jnp.allclose(out, ref_f32, atol=1e-1, rtol=1e-1), \
        f"max abs diff vs f32 ref: {err_loose}"

    print("KERNEL_OK")
</pallas_src>

<mosaic_0001>
module attributes {stable_mosaic.version = 11 : i64} {
  func.func @conv_stats_kernel(%arg0: i32, %arg1: i32, %arg2: memref<1x18x16x12xbf16, #tpu.memory_space<vmem>>, %arg3: memref<36x128xbf16, #tpu.memory_space<vmem>>, %arg4: memref<1x1x1x128xf32, #tpu.memory_space<vmem>>, %arg5: memref<1x1x1x128xf32, #tpu.memory_space<vmem>>) attributes {dimension_semantics = [#tpu.dimension_semantics<parallel>, #tpu.dimension_semantics<parallel>], iteration_bounds = array<i64: 2, 1>, scalar_prefetch = 0 : i64, scratch_operands = 0 : i64, tpu.core_type = #tpu.core_type<tc>, window_params = [{transform_indices = @transform_0, window_bounds = array<i64: 1, 18, 16, 12>}, {pipeline_mode = #tpu.pipeline_mode<synchronous>, transform_indices = @transform_1, window_bounds = array<i64: 36, 128>}, {transform_indices = @transform_2, window_bounds = array<i64: 1, 1, 1, 128>}, {transform_indices = @transform_3, window_bounds = array<i64: 1, 1, 1, 128>}]} {
    %c16_i32 = arith.constant 16 : i32
    %0 = arith.muli %arg1, %c16_i32 : i32
    %c1_i32 = arith.constant 1 : i32
    %1 = arith.muli %0, %c1_i32 : i32
    %2 = tpu.assume_multiple %1, 16 : i32
    %c0_i32 = arith.constant 0 : i32
    %3 = arith.addi %2, %c0_i32 : i32
    %c0 = arith.constant 0 : index
    %4 = arith.index_cast %3 : i32 to index
    %c0_0 = arith.constant 0 : index
    %c0_1 = arith.constant 0 : index
    %5 = vector.load %arg2[%c0, %4, %c0_0, %c0_1] : memref<1x18x16x12xbf16, #tpu.memory_space<vmem>>, vector<1x16x16x12xbf16>
    %6 = vector.shape_cast %5 : vector<1x16x16x12xbf16> to vector<16x16x12xbf16>
    %7 = vector.shape_cast %6 : vector<16x16x12xbf16> to vector<256x12xbf16>
    %c1_i32_2 = arith.constant 1 : i32
    %8 = arith.addi %2, %c1_i32_2 : i32
    %c0_3 = arith.constant 0 : index
    %9 = arith.index_cast %8 : i32 to index
    %c0_4 = arith.constant 0 : index
    %c0_5 = arith.constant 0 : index
    %10 = vector.load %arg2[%c0_3, %9, %c0_4, %c0_5] : memref<1x18x16x12xbf16, #tpu.memory_space<vmem>>, vector<1x16x16x12xbf16>
    %11 = vector.shape_cast %10 : vector<1x16x16x12xbf16> to vector<16x16x12xbf16>
    %12 = vector.shape_cast %11 : vector<16x16x12xbf16> to vector<256x12xbf16>
    %c2_i32 = arith.constant 2 : i32
    %13 = arith.addi %2, %c2_i32 : i32
    %c0_6 = arith.constant 0 : index
    %14 = arith.index_cast %13 : i32 to index
    %c0_7 = arith.constant 0 : index
    %c0_8 = arith.constant 0 : index
    %15 = vector.load %arg2[%c0_6, %14, %c0_7, %c0_8] : memref<1x18x16x12xbf16, #tpu.memory_space<vmem>>, vector<1x16x16x12xbf16>
    %16 = vector.shape_cast %15 : vector<1x16x16x12xbf16> to vector<16x16x12xbf16>
    %17 = vector.shape_cast %16 : vector<16x16x12xbf16> to vector<256x12xbf16>
    %18 = tpu.concatenate %7, %12, %17 in 1 : vector<256x12xbf16>, vector<256x12xbf16>, vector<256x12xbf16> -> vector<256x36xbf16>
    %c0_9 = arith.constant 0 : index
    %c0_10 = arith.constant 0 : index
    %19 = vector.load %arg3[%c0_9, %c0_10] : memref<36x128xbf16, #tpu.memory_space<vmem>>, vector<36x128xbf16>
    %cst = arith.constant dense<0.000000e+00> : vector<256x128xf32>
    %20 = tpu.matmul %18, %19, %cst {dimension_numbers = #tpu.dot_dimension_numbers<[1], [0], [0], [1], [0, 0, 1, 1], [], []>} : vector<256x36xbf16>, vector<36x128xbf16>, vector<256x128xf32> -> vector<256x128xf32>
    %cst_11 = arith.constant dense<0.000000e+00> : vector<128xf32>
    %21 = vector.multi_reduction <add>, %20, %cst_11 [0] : vector<256x128xf32> to vector<128xf32>
    %22 = vector.shape_cast %21 : vector<128xf32> to vector<1x128xf32>
    %c0_12 = arith.constant 0 : index
    %c0_13 = arith.constant 0 : index
    %c0_14 = arith.constant 0 : index
    %c0_15 = arith.constant 0 : index
    %23 = vector.load %arg4[%c0_12, %c0_13, %c0_14, %c0_15] : memref<1x1x1x128xf32, #tpu.memory_space<vmem>>, vector<1x1x1x128xf32>
    %24 = vector.shape_cast %23 : vector<1x1x1x128xf32> to vector<1x128xf32>
    %25 = vector.shape_cast %22 : vector<1x128xf32> to vector<1x1x1x128xf32>
    tpu.vector_store %arg4[%c0_12, %c0_13, %c0_14, %c0_15], %25 {strides = array<i32>} : memref<1x1x1x128xf32, #tpu.memory_space<vmem>>, vector<1x1x1x128xf32>,
    %26 = arith.mulf %20, %20 : vector<256x128xf32>
    %cst_16 = arith.constant dense<0.000000e+00> : vector<128xf32>
    %27 = vector.multi_reduction <add>, %26, %cst_16 [0] : vector<256x128xf32> to vector<128xf32>
    %28 = vector.shape_cast %27 : vector<128xf32> to vector<1x128xf32>
    %c0_17 = arith.constant 0 : index
    %c0_18 = arith.constant 0 : index
    %c0_19 = arith.constant 0 : index
    %c0_20 = arith.constant 0 : index
    %29 = vector.load %arg5[%c0_17, %c0_18, %c0_19, %c0_20] : memref<1x1x1x128xf32, #tpu.memory_space<vmem>>, vector<1x1x1x128xf32>
    %30 = vector.shape_cast %29 : vector<1x1x1x128xf32> to vector<1x128xf32>
    %31 = vector.shape_cast %28 : vector<1x128xf32> to vector<1x1x1x128xf32>
    tpu.vector_store %arg5[%c0_17, %c0_18, %c0_19, %c0_20], %31 {strides = array<i32>} : memref<1x1x1x128xf32, #tpu.memory_space<vmem>>, vector<1x1x1x128xf32>,
    return
  }
  func.func @transform_0(%arg0: i32, %arg1: i32) -> (i32, i32, i32, i32) {
    %c0_i32 = arith.constant 0 : i32
    %c0_i32_0 = arith.constant 0 : i32
    %c0_i32_1 = arith.constant 0 : i32
    %c0_i32_2 = arith.constant 0 : i32
    return %arg0, %c0_i32, %c0_i32_0, %c0_i32_1 : i32, i32, i32, i32
  }
  func.func @transform_1(%arg0: i32, %arg1: i32) -> (i32, i32) {
    %c0_i32 = arith.constant 0 : i32
    %c0_i32_0 = arith.constant 0 : i32
    %c0_i32_1 = arith.constant 0 : i32
    return %c0_i32, %c0_i32_0 : i32, i32
  }
  func.func @transform_2(%arg0: i32, %arg1: i32) -> (i32, i32, i32, i32) {
    %c0_i32 = arith.constant 0 : i32
    %c0_i32_0 = arith.constant 0 : i32
    %c0_i32_1 = arith.constant 0 : i32
    return %arg0, %arg1, %c0_i32, %c0_i32_0 : i32, i32, i32, i32
  }
  func.func @transform_3(%arg0: i32, %arg1: i32) -> (i32, i32, i32, i32) {
    %c0_i32 = arith.constant 0 : i32
    %c0_i32_0 = arith.constant 0 : i32
    %c0_i32_1 = arith.constant 0 : i32
    return %arg0, %arg1, %c0_i32, %c0_i32_0 : i32, i32, i32, i32
  }
}

</mosaic_0001>

<llo_original>
// kernel: tpu_custom_call.1
$region0: #{tpu_custom_call.1}
  #allocation0 [shape = 'u32[]', space=smem, size = 0x4, offset = 0x4, fixed_abs, tag = 'smem constant byte address 0x4 - core index']
  #allocation1 [shape = 'u32[72,128]{1,0:T(1,128)}', space=vmem, size = 0x9000, scoped, tag = 'internal scratch']
  %s0 = inlined_call_operand.vmem [shape: bf16[2,18,16,12], index: 0, kind: input, shape index: {}]
  %s1 = inlined_call_operand.vmem [shape: bf16[36,128], index: 1, kind: input, shape index: {}]
  %s2 = inlined_call_operand.hbm [shape: f32[2,1,1,128], index: 2, kind: output, shape index: {0}]
  %s3 = inlined_call_operand.hbm [shape: f32[2,1,1,128], index: 3, kind: output, shape index: {1}]
  %4 = xla_tuple %s2, %s3
  %s5 = sld [smem:[#allocation0]]
  $region49: #{tpu_custom_call.1} parent=0
    _
  %s7 = ssub.s32 1, %s5
  %s8 = scalar_select 0, %s7, %s5
  $region1: #{tpu_custom_call.1} parent=0
    #allocation2 [shape = 'u8[1024]{0}', space=vmem, size = 0x400, scoped, tag = 'output window, operand 0']
    #allocation3 [shape = 's32[2]{0}', space=sflag, size = 0x8, scoped, tag = 'scoped memory for tpu_custom_call.1']
    #allocation4 [shape = 'u8[1024]{0}', space=vmem, size = 0x400, scoped, tag = 'output window, operand 1']
    #allocation5 [shape = 's32[2]{0}', space=sflag, size = 0x8, scoped, tag = 'scoped memory for tpu_custom_call.1']
    %9 = vsyncpa [#allocation3], 0
    %s10 = scalar_lea.sflag [#allocation3], 1
    %11 = vsyncpa %s10, 0
    %12 = vsyncpa [#allocation5], 0
    %s13 = scalar_lea.sflag [#allocation5], 1
    %14 = vsyncpa %s13, 0
    loop: start=0, step=1, limit=4
    $region2: #{tpu_custom_call.1} parent=1 // loop_pre_header
      _
    $region3: #{tpu_custom_call.1} parent=1 // loop_header
      %s16 = sphi 0, %s20
      %p17 = scmp.ge.s32.totalorder %s16, 4
      %s23 = sphi 0, %s35
      %s24 = sphi 0, %s31
      %s25 = sphi 0, %s23
      %s26 = sphi 0, %s24
      %s27 = sphi 0, %s25
      %s28 = sphi 0, %s26
      %s38 = sphi 0, %s40
      %s41 = sphi 0, %s38
      %s42 = sphi 0, %s41
      %s58 = sphi 0, %s42
      %s62 = sphi 0, %s62
      %s64 = sphi 0, %s62
      %s65 = sphi 0, %s64
      %s79 = sphi 0, %s65
      %s87 = sphi 0, %s89
      %s90 = sphi 0, %s87
      %s91 = sphi 0, %s90
      %s107 = sphi 0, %s91
      %s115 = sphi 0, %s117
      %s118 = sphi 0, %s115
      %s119 = sphi 0, %s118
      %s135 = sphi 0, %s119
    $region4: #{tpu_custom_call.1} parent=1 // loop_header_branch
      %19 = sbr.rel (%p17) target = $region8
    $region5: #{tpu_custom_call.1} parent=1 // loop_body
      %s21 = ssub.s32 %s16, 1
      %s22 = ssub.s32 %s16, 2
      %s29 = sadd.s32 1, %s24
      %p30 = scmp.ge.s32.totalorder %s29, 1
      %s31 = scalar_select %p30, 0, %s29
      %s32 = sadd.s32 1, %s23
      %s33 = scalar_select %p30, %s32, %s23
      %p34 = scmp.ge.s32.totalorder %s33, 2
      %s35 = scalar_select %p34, 0, %s33
      %s36 = ssub.s32 %s23, %s35
      %p37 = scmp.eq.s32.totalorder %s36, 0
      %s39 = sadd.s32 %s38, 1
      %s40 = scalar_select %p37, %s38, %s39
      %p43 = pneg %p37
      %p44 = scmp.eq.s32.totalorder %s16, 1
      %p45 = por %p43, %p44
      %p46 = scmp.ne.s32.totalorder %s38, %s41
      %p47 = scmp.eq.s32.totalorder %s16, 0
      %p48 = por %p46, %p47
      %p49 = scmp.ne.s32.totalorder %s38, %s41
      %p50 = scmp.eq.s32.totalorder %s21, 1
      %p51 = por %p49, %p50
      %p52 = scmp.ne.s32.totalorder %s41, %s42
      %p53 = scmp.eq.s32.totalorder %s21, 0
      %p54 = por %p52, %p53
      %p55 = scmp.ne.s32.totalorder %s41, %s42
      %p56 = scmp.eq.s32.totalorder %s22, 1
      %p57 = por %p55, %p56
      %p59 = scmp.ne.s32.totalorder %s42, %s58
      %p60 = scmp.eq.s32.totalorder %s22, 0
      %p61 = por %p59, %p60
      %s63 = sadd.s32 %s62, 1
      %p66 = scmp.eq.s32.totalorder %s16, 1
      %p67 = scmp.ne.s32.totalorder %s62, %s64
      %p68 = scmp.eq.s32.totalorder %s16, 0
      %p69 = por %p67, %p68
      %p70 = scmp.ne.s32.totalorder %s62, %s64
      %p71 = scmp.eq.s32.totalorder %s21, 1
      %p72 = por %p70, %p71
      %p73 = scmp.ne.s32.totalorder %s64, %s65
      %p74 = scmp.eq.s32.totalorder %s21, 0
      %p75 = por %p73, %p74
      %p76 = scmp.ne.s32.totalorder %s64, %s65
      %p77 = scmp.eq.s32.totalorder %s22, 1
      %p78 = por %p76, %p77
      %p80 = scmp.ne.s32.totalorder %s65, %s79
      %p81 = scmp.eq.s32.totalorder %s22, 0
      %p82 = por %p80, %p81
      %s83 = ssub.s32 %s23, %s35
      %s84 = ssub.s32 %s24, %s31
      %s85 = sor.u32 %s83, %s84
      %p86 = scmp.eq.s32.totalorder %s85, 0
      %s88 = sadd.s32 %s87, 1
      %s89 = scalar_select %p86, %s87, %s88
      %p92 = pneg %p86
      %p93 = scmp.eq.s32.totalorder %s16, 1
      %p94 = por %p92, %p93
      %p95 = scmp.ne.s32.totalorder %s87, %s90
      %p96 = scmp.eq.s32.totalorder %s16, 0
      %p97 = por %p95, %p96
      %p98 = scmp.ne.s32.totalorder %s87, %s90
      %p99 = scmp.eq.s32.totalorder %s21, 1
      %p100 = por %p98, %p99
      %p101 = scmp.ne.s32.totalorder %s90, %s91
      %p102 = scmp.eq.s32.totalorder %s21, 0
      %p103 = por %p101, %p102
      %p104 = scmp.ne.s32.totalorder %s90, %s91
      %p105 = scmp.eq.s32.totalorder %s22, 1
      %p106 = por %p104, %p105
      %p108 = scmp.ne.s32.totalorder %s91, %s107
      %p109 = scmp.eq.s32.totalorder %s22, 0
      %p110 = por %p108, %p109
      %s111 = ssub.s32 %s23, %s35
      %s112 = ssub.s32 %s24, %s31
      %s113 = sor.u32 %s111, %s112
      %p114 = scmp.eq.s32.totalorder %s113, 0
      %s116 = sadd.s32 %s115, 1
      %s117 = scalar_select %p114, %s115, %s116
      %p120 = pneg %p114
      %p121 = scmp.eq.s32.totalorder %s16, 1
      %p122 = por %p120, %p121
      %p123 = scmp.ne.s32.totalorder %s115, %s118
      %p124 = scmp.eq.s32.totalorder %s16, 0
      %p125 = por %p123, %p124
      %p126 = scmp.ne.s32.totalorder %s115, %s118
      %p127 = scmp.eq.s32.totalorder %s21, 1
      %p128 = por %p126, %p127
      %p129 = scmp.ne.s32.totalorder %s118, %s119
      %p130 = scmp.eq.s32.totalorder %s21, 0
      %p131 = por %p129, %p130
      %p132 = scmp.ne.s32.totalorder %s118, %s119
      %p133 = scmp.eq.s32.totalorder %s22, 1
      %p134 = por %p132, %p133
      %p136 = scmp.ne.s32.totalorder %s119, %s135
      %p137 = scmp.eq.s32.totalorder %s22, 0
      %p138 = por %p136, %p137
      %p139 = scmp.le.s32.totalorder 1, %s16
      %p140 = scmp.lt.s32.totalorder %s16, 3
      %p141 = pnand %p139, %p140
      %p142 = pneg %p141
      // Predicated region
      $region9: #{tpu_custom_call.1} parent=5 // pred_check
        _
      $region10: #{tpu_custom_call.1} parent=5 // pred_check_branch
        %144 = sbr.rel (%p141) target = $region12
      $region11: #{tpu_custom_call.1} parent=5 // pred_region
        %s145 = ssub.s32 %s16, 1
        // Predicated region
        $region13: #{tpu_custom_call.1} parent=11 // pred_check
          %p146 = pneg %p75
        $region14: #{tpu_custom_call.1} parent=11 // pred_check_branch
          %148 = sbr.rel (%p146) target = $region16
        $region15: #{tpu_custom_call.1} parent=11 // pred_region
          _
        $region16: #{tpu_custom_call.1} parent=11 // pred_fallthru
          _
      $region12: #{tpu_custom_call.1} parent=5 // pred_fallthru
        _
      %p149 = scmp.lt.s32.totalorder %s16, 2
      // Predicated region
      $region17: #{tpu_custom_call.1} parent=5 // pred_check
        %p150 = pneg %p149
      $region18: #{tpu_custom_call.1} parent=5 // pred_check_branch
        %152 = sbr.rel (%p150) target = $region20
      $region19: #{tpu_custom_call.1} parent=5 // pred_region
        // Predicated region
        $region21: #{tpu_custom_call.1} parent=19 // pred_check
          %p153 = pneg %p48
        $region22: #{tpu_custom_call.1} parent=19 // pred_check_branch
          %155 = sbr.rel (%p153) target = $region24
        $region23: #{tpu_custom_call.1} parent=19 // pred_region
          %p156 = scmp.lt.s32.totalorder %s23, 1
          %s157 = scalar_select %p156, %s23, 1
          %s158 = smul.addr %s157, 36
          %s159 = smul.addr %s158, 4
          %s160 = scalar_lea.vmem %s0, %s159
        $region24: #{tpu_custom_call.1} parent=19 // pred_fallthru
          _
      $region20: #{tpu_custom_call.1} parent=5 // pred_fallthru
        _
      %p161 = scmp.le.s32.totalorder 1, %s16
      %p162 = scmp.lt.s32.totalorder %s16, 3
      %p163 = pnand %p161, %p162
      %p164 = pneg %p163
      // Predicated region
      $region25: #{tpu_custom_call.1} parent=5 // pred_check
        _
      $region26: #{tpu_custom_call.1} parent=5 // pred_check_branch
        %166 = sbr.rel (%p163) target = $region28
      $region27: #{tpu_custom_call.1} parent=5 // pred_region
        %s167 = ssub.s32 %s16, 1
        %p168 = scmp.lt.s32.totalorder %s25, 1
        %s169 = scalar_select %p168, %s25, 1
        %s170 = smul.addr %s169, 36
        %s171 = smul.addr %s170, 4
        %s172 = scalar_lea.vmem %s0, %s171
        %p173 = pneg %p54
        %p174 = pneg %p51
        %p175 = pneg %p75
        %p176 = pneg %p72
        %p177 = pneg %p103
        %p178 = pneg %p100
        %s179 = sand.u32 %s90, 1
        %s180 = scalar_lea.sflag [#allocation3], %s179
        %s181 = sand.u32 %s90, 1
        %s182 = scalar_lea.vmem [#allocation2], %s181
        %p183 = pneg %p131
        %p184 = pneg %p128
        %s185 = sand.u32 %s118, 1
        %s186 = scalar_lea.sflag [#allocation5], %s185
        %s187 = sand.u32 %s118, 1
        %s188 = scalar_lea.vmem [#allocation4], %s187
        %p189 = scmp.lt.s32.totalorder %s25, 1
        %s190 = scalar_select %p189, %s25, 1
        %s191 = smul.addr %s190, 36
        %s192 = smul.addr %s191, 4
        %s193 = scalar_lea.vmem %s0, %s192
        %s195 = smul.u32 %s26, 16
        %s196 = smul.u32 %s195, 2
        %s197 = smul.addr %s196, 4
        %s198 = scalar_lea.vmem %s193, %s197
        %v199 = vld [vmem:[%s198] sm:$0xf]
        %v200 = vld [vmem:[%s198 + $0x4] sm:$0xf]
        %v201 = vld [vmem:[%s198 + $0x8] sm:$0xf]
        %v202 = vld [vmem:[%s198 + $0xc] sm:$0xf]
        %v203 = vld [vmem:[%s198 + $0x10] sm:$0xf]
        %v204 = vld [vmem:[%s198 + $0x14] sm:$0xf]
        %v205 = vld [vmem:[%s198 + $0x18] sm:$0xf]
        %v206 = vld [vmem:[%s198 + $0x1c] sm:$0xf]
        %v207 = vld [vmem:[%s198 + $0x20] sm:$0xf]
        %v208 = vld [vmem:[%s198 + $0x24] sm:$0xf]
        %v209 = vld [vmem:[%s198 + $0x28] sm:$0xf]
        %v210 = vld [vmem:[%s198 + $0x2c] sm:$0xf]
        %v211 = vld [vmem:[%s198 + $0x30] sm:$0xf]
        %v212 = vld [vmem:[%s198 + $0x34] sm:$0xf]
        %v213 = vld [vmem:[%s198 + $0x38] sm:$0xf]
        %v214 = vld [vmem:[%s198 + $0x3c] sm:$0xf]
        %v215 = vld [vmem:[%s198 + $0x40] sm:$0xf]
        %v216 = vld [vmem:[%s198 + $0x44] sm:$0xf]
        %v217 = vld [vmem:[%s198 + $0x48] sm:$0xf]
        %v218 = vld [vmem:[%s198 + $0x4c] sm:$0xf]
        %v219 = vld [vmem:[%s198 + $0x50] sm:$0xf]
        %v220 = vld [vmem:[%s198 + $0x54] sm:$0xf]
        %v221 = vld [vmem:[%s198 + $0x58] sm:$0xf]
        %v222 = vld [vmem:[%s198 + $0x5c] sm:$0xf]
        %v223 = vld [vmem:[%s198 + $0x60] sm:$0xf]
        %v224 = vld [vmem:[%s198 + $0x64] sm:$0xf]
        %v225 = vld [vmem:[%s198 + $0x68] sm:$0xf]
        %v226 = vld [vmem:[%s198 + $0x6c] sm:$0xf]
        %v227 = vld [vmem:[%s198 + $0x70] sm:$0xf]
        %v228 = vld [vmem:[%s198 + $0x74] sm:$0xf]
        %v229 = vld [vmem:[%s198 + $0x78] sm:$0xf]
        %v230 = vld [vmem:[%s198 + $0x7c] sm:$0xf]
        %s231 = sadd.s32 %s195, 1
        %s232 = smul.u32 %s231, 2
        %s233 = smul.addr %s232, 4
        %s234 = scalar_lea.vmem %s193, %s233
        %v235 = vld [vmem:[%s234] sm:$0xf]
        %v236 = vld [vmem:[%s234 + $0x4] sm:$0xf]
        %v237 = vld [vmem:[%s234 + $0x8] sm:$0xf]
        %v238 = vld [vmem:[%s234 + $0xc] sm:$0xf]
        %v239 = vld [vmem:[%s234 + $0x10] sm:$0xf]
        %v240 = vld [vmem:[%s234 + $0x14] sm:$0xf]
        %v241 = vld [vmem:[%s234 + $0x18] sm:$0xf]
        %v242 = vld [vmem:[%s234 + $0x1c] sm:$0xf]
        %v243 = vld [vmem:[%s234 + $0x20] sm:$0xf]
        %v244 = vld [vmem:[%s234 + $0x24] sm:$0xf]
        %v245 = vld [vmem:[%s234 + $0x28] sm:$0xf]
        %v246 = vld [vmem:[%s234 + $0x2c] sm:$0xf]
        %v247 = vld [vmem:[%s234 + $0x30] sm:$0xf]
        %v248 = vld [vmem:[%s234 + $0x34] sm:$0xf]
        %v249 = vld [vmem:[%s234 + $0x38] sm:$0xf]
        %v250 = vld [vmem:[%s234 + $0x3c] sm:$0xf]
        %v251 = vld [vmem:[%s234 + $0x40] sm:$0xf]
        %v252 = vld [vmem:[%s234 + $0x44] sm:$0xf]
        %v253 = vld [vmem:[%s234 + $0x48] sm:$0xf]
        %v254 = vld [vmem:[%s234 + $0x4c] sm:$0xf]
        %v255 = vld [vmem:[%s234 + $0x50] sm:$0xf]
        %v256 = vld [vmem:[%s234 + $0x54] sm:$0xf]
        %v257 = vld [vmem:[%s234 + $0x58] sm:$0xf]
        %v258 = vld [vmem:[%s234 + $0x5c] sm:$0xf]
        %v259 = vld [vmem:[%s234 + $0x60] sm:$0xf]
        %v260 = vld [vmem:[%s234 + $0x64] sm:$0xf]
        %v261 = vld [vmem:[%s234 + $0x68] sm:$0xf]
        %v262 = vld [vmem:[%s234 + $0x6c] sm:$0xf]
        %v263 = vld [vmem:[%s234 + $0x70] sm:$0xf]
        %v264 = vld [vmem:[%s234 + $0x74] sm:$0xf]
        %v265 = vld [vmem:[%s234 + $0x78] sm:$0xf]
        %v266 = vld [vmem:[%s234 + $0x7c] sm:$0xf]
        %s267 = sadd.s32 %s195, 2
        %s268 = smul.u32 %s267, 2
        %s269 = smul.addr %s268, 4
        %s270 = scalar_lea.vmem %s193, %s269
        %v271 = vld [vmem:[%s270] sm:$0xf]
        %v272 = vld [vmem:[%s270 + $0x4] sm:$0xf]
        %v273 = vld [vmem:[%s270 + $0x8] sm:$0xf]
        %v274 = vld [vmem:[%s270 + $0xc] sm:$0xf]
        %v275 = vld [vmem:[%s270 + $0x10] sm:$0xf]
        %v276 = vld [vmem:[%s270 + $0x14] sm:$0xf]
        %v277 = vld [vmem:[%s270 + $0x18] sm:$0xf]
        %v278 = vld [vmem:[%s270 + $0x1c] sm:$0xf]
        %v279 = vld [vmem:[%s270 + $0x20] sm:$0xf]
        %v280 = vld [vmem:[%s270 + $0x24] sm:$0xf]
        %v281 = vld [vmem:[%s270 + $0x28] sm:$0xf]
        %v282 = vld [vmem:[%s270 + $0x2c] sm:$0xf]
        %v283 = vld [vmem:[%s270 + $0x30] sm:$0xf]
        %v284 = vld [vmem:[%s270 + $0x34] sm:$0xf]
        %v285 = vld [vmem:[%s270 + $0x38] sm:$0xf]
        %v286 = vld [vmem:[%s270 + $0x3c] sm:$0xf]
        %v287 = vld [vmem:[%s270 + $0x40] sm:$0xf]
        %v288 = vld [vmem:[%s270 + $0x44] sm:$0xf]
        %v289 = vld [vmem:[%s270 + $0x48] sm:$0xf]
        %v290 = vld [vmem:[%s270 + $0x4c] sm:$0xf]
        %v291 = vld [vmem:[%s270 + $0x50] sm:$0xf]
        %v292 = vld [vmem:[%s270 + $0x54] sm:$0xf]
        %v293 = vld [vmem:[%s270 + $0x58] sm:$0xf]
        %v294 = vld [vmem:[%s270 + $0x5c] sm:$0xf]
        %v295 = vld [vmem:[%s270 + $0x60] sm:$0xf]
        %v296 = vld [vmem:[%s270 + $0x64] sm:$0xf]
        %v297 = vld [vmem:[%s270 + $0x68] sm:$0xf]
        %v298 = vld [vmem:[%s270 + $0x6c] sm:$0xf]
        %v299 = vld [vmem:[%s270 + $0x70] sm:$0xf]
        %v300 = vld [vmem:[%s270 + $0x74] sm:$0xf]
        %v301 = vld [vmem:[%s270 + $0x78] sm:$0xf]
        %v302 = vld [vmem:[%s270 + $0x7c] sm:$0xf]
        %v335 = vunpack.c.l.b16 %v199
        %v336 = vunpack.c.l.b16 %v200
        %v337 = vunpack.c.l.b16 %v201
        %v338 = vunpack.c.l.b16 %v202
        %v339 = vunpack.c.l.b16 %v203
        %v340 = vunpack.c.l.b16 %v204
        %v341 = vunpack.c.l.b16 %v205
        %v342 = vunpack.c.l.b16 %v206
        %v343 = vunpack.c.l.b16 %v207
        %v344 = vunpack.c.l.b16 %v208
        %v345 = vunpack.c.l.b16 %v209
        %v346 = vunpack.c.l.b16 %v210
        %v347 = vunpack.c.l.b16 %v211
        %v348 = vunpack.c.l.b16 %v212
        %v349 = vunpack.c.l.b16 %v213
        %v350 = vunpack.c.l.b16 %v214
        %v351 = vunpack.c.l.b16 %v215
        %v352 = vunpack.c.l.b16 %v216
        %v353 = vunpack.c.l.b16 %v217
        %v354 = vunpack.c.l.b16 %v218
        %v355 = vunpack.c.l.b16 %v219
        %v356 = vunpack.c.l.b16 %v220
        %v357 = vunpack.c.l.b16 %v221
        %v358 = vunpack.c.l.b16 %v222
        %v359 = vunpack.c.l.b16 %v223
        %v360 = vunpack.c.l.b16 %v224
        %v361 = vunpack.c.l.b16 %v225
        %v362 = vunpack.c.l.b16 %v226
        %v363 = vunpack.c.l.b16 %v227
        %v364 = vunpack.c.l.b16 %v228
        %v365 = vunpack.c.l.b16 %v229
        %v366 = vunpack.c.l.b16 %v230
        %v367 = vpack.c.b16 %v336, %v335
        %v368 = vpack.c.b16 %v338, %v337
        %v369 = vpack.c.b16 %v340, %v339
        %v370 = vpack.c.b16 %v342, %v341
        %v371 = vpack.c.b16 %v344, %v343
        %v372 = vpack.c.b16 %v346, %v345
        %v373 = vpack.c.b16 %v348, %v347
        %v374 = vpack.c.b16 %v350, %v349
        %v375 = vpack.c.b16 %v352, %v351
        %v376 = vpack.c.b16 %v354, %v353
        %v377 = vpack.c.b16 %v356, %v355
        %v378 = vpack.c.b16 %v358, %v357
        %v379 = vpack.c.b16 %v360, %v359
        %v380 = vpack.c.b16 %v362, %v361
        %v381 = vpack.c.b16 %v364, %v363
        %v382 = vpack.c.b16 %v366, %v365
        %v415 = vunpack.c.l.b16 %v235
        %v416 = vunpack.c.l.b16 %v236
        %v417 = vunpack.c.l.b16 %v237
        %v418 = vunpack.c.l.b16 %v238
        %v419 = vunpack.c.l.b16 %v239
        %v420 = vunpack.c.l.b16 %v240
        %v421 = vunpack.c.l.b16 %v241
        %v422 = vunpack.c.l.b16 %v242
        %v423 = vunpack.c.l.b16 %v243
        %v424 = vunpack.c.l.b16 %v244
        %v425 = vunpack.c.l.b16 %v245
        %v426 = vunpack.c.l.b16 %v246
        %v427 = vunpack.c.l.b16 %v247
        %v428 = vunpack.c.l.b16 %v248
        %v429 = vunpack.c.l.b16 %v249
        %v430 = vunpack.c.l.b16 %v250
        %v431 = vunpack.c.l.b16 %v251
        %v432 = vunpack.c.l.b16 %v252
        %v433 = vunpack.c.l.b16 %v253
        %v434 = vunpack.c.l.b16 %v254
        %v435 = vunpack.c.l.b16 %v255
        %v436 = vunpack.c.l.b16 %v256
        %v437 = vunpack.c.l.b16 %v257
        %v438 = vunpack.c.l.b16 %v258
        %v439 = vunpack.c.l.b16 %v259
        %v440 = vunpack.c.l.b16 %v260
        %v441 = vunpack.c.l.b16 %v261
        %v442 = vunpack.c.l.b16 %v262
        %v443 = vunpack.c.l.b16 %v263
        %v444 = vunpack.c.l.b16 %v264
        %v445 = vunpack.c.l.b16 %v265
        %v446 = vunpack.c.l.b16 %v266
        %v447 = vpack.c.b16 %v416, %v415
        %v448 = vpack.c.b16 %v418, %v417
        %v449 = vpack.c.b16 %v420, %v419
        %v450 = vpack.c.b16 %v422, %v421
        %v451 = vpack.c.b16 %v424, %v423
        %v452 = vpack.c.b16 %v426, %v425
        %v453 = vpack.c.b16 %v428, %v427
        %v454 = vpack.c.b16 %v430, %v429
        %v455 = vpack.c.b16 %v432, %v431
        %v456 = vpack.c.b16 %v434, %v433
        %v457 = vpack.c.b16 %v436, %v435
        %v458 = vpack.c.b16 %v438, %v437
        %v459 = vpack.c.b16 %v440, %v439
        %v460 = vpack.c.b16 %v442, %v441
        %v461 = vpack.c.b16 %v444, %v443
        %v462 = vpack.c.b16 %v446, %v445
        %463 = vrot.lane.b32.xlu0 %v447, 12
        %v464 = vpop.permute.xlu0 %463
        %465 = vrot.lane.b32.xlu0 %v448, 12
        %v466 = vpop.permute.xlu0 %465
        %467 = vrot.lane.b32.xlu0 %v449, 12
        %v468 = vpop.permute.xlu0 %467
        %469 = vrot.lane.b32.xlu0 %v450, 12
        %v470 = vpop.permute.xlu0 %469
        %471 = vrot.lane.b32.xlu0 %v451, 12
        %v472 = vpop.permute.xlu0 %471
        %473 = vrot.lane.b32.xlu0 %v452, 12
        %v474 = vpop.permute.xlu0 %473
        %475 = vrot.lane.b32.xlu0 %v453, 12
        %v476 = vpop.permute.xlu0 %475
        %477 = vrot.lane.b32.xlu0 %v454, 12
        %v478 = vpop.permute.xlu0 %477
        %479 = vrot.lane.b32.xlu0 %v455, 12
        %v480 = vpop.permute.xlu0 %479
        %481 = vrot.lane.b32.xlu0 %v456, 12
        %v482 = vpop.permute.xlu0 %481
        %483 = vrot.lane.b32.xlu0 %v457, 12
        %v484 = vpop.permute.xlu0 %483
        %485 = vrot.lane.b32.xlu0 %v458, 12
        %v486 = vpop.permute.xlu0 %485
        %487 = vrot.lane.b32.xlu0 %v459, 12
        %v488 = vpop.permute.xlu0 %487
        %489 = vrot.lane.b32.xlu0 %v460, 12
        %v490 = vpop.permute.xlu0 %489
        %491 = vrot.lane.b32.xlu0 %v461, 12
        %v492 = vpop.permute.xlu0 %491
        %493 = vrot.lane.b32.xlu0 %v462, 12
        %v494 = vpop.permute.xlu0 %493
        %v527 = vunpack.c.l.b16 %v271
        %v528 = vunpack.c.l.b16 %v272
        %v529 = vunpack.c.l.b16 %v273
        %v530 = vunpack.c.l.b16 %v274
        %v531 = vunpack.c.l.b16 %v275
        %v532 = vunpack.c.l.b16 %v276
        %v533 = vunpack.c.l.b16 %v277
        %v534 = vunpack.c.l.b16 %v278
        %v535 = vunpack.c.l.b16 %v279
        %v536 = vunpack.c.l.b16 %v280
        %v537 = vunpack.c.l.b16 %v281
        %v538 = vunpack.c.l.b16 %v282
        %v539 = vunpack.c.l.b16 %v283
        %v540 = vunpack.c.l.b16 %v284
        %v541 = vunpack.c.l.b16 %v285
        %v542 = vunpack.c.l.b16 %v286
        %v543 = vunpack.c.l.b16 %v287
        %v544 = vunpack.c.l.b16 %v288
        %v545 = vunpack.c.l.b16 %v289
        %v546 = vunpack.c.l.b16 %v290
        %v547 = vunpack.c.l.b16 %v291
        %v548 = vunpack.c.l.b16 %v292
        %v549 = vunpack.c.l.b16 %v293
        %v550 = vunpack.c.l.b16 %v294
        %v551 = vunpack.c.l.b16 %v295
        %v552 = vunpack.c.l.b16 %v296
        %v553 = vunpack.c.l.b16 %v297
        %v554 = vunpack.c.l.b16 %v298
        %v555 = vunpack.c.l.b16 %v299
        %v556 = vunpack.c.l.b16 %v300
        %v557 = vunpack.c.l.b16 %v301
        %v558 = vunpack.c.l.b16 %v302
        %v559 = vpack.c.b16 %v528, %v527
        %v560 = vpack.c.b16 %v530, %v529
        %v561 = vpack.c.b16 %v532, %v531
        %v562 = vpack.c.b16 %v534, %v533
        %v563 = vpack.c.b16 %v536, %v535
        %v564 = vpack.c.b16 %v538, %v537
        %v565 = vpack.c.b16 %v540, %v539
        %v566 = vpack.c.b16 %v542, %v541
        %v567 = vpack.c.b16 %v544, %v543
        %v568 = vpack.c.b16 %v546, %v545
        %v569 = vpack.c.b16 %v548, %v547
        %v570 = vpack.c.b16 %v550, %v549
        %v571 = vpack.c.b16 %v552, %v551
        %v572 = vpack.c.b16 %v554, %v553
        %v573 = vpack.c.b16 %v556, %v555
        %v574 = vpack.c.b16 %v558, %v557
        %575 = vrot.lane.b32.xlu0 %v559, 24
        %v576 = vpop.permute.xlu0 %575
        %577 = vrot.lane.b32.xlu0 %v560, 24
        %v578 = vpop.permute.xlu0 %577
        %579 = vrot.lane.b32.xlu0 %v561, 24
        %v580 = vpop.permute.xlu0 %579
        %581 = vrot.lane.b32.xlu0 %v562, 24
        %v582 = vpop.permute.xlu0 %581
        %583 = vrot.lane.b32.xlu0 %v563, 24
        %v584 = vpop.permute.xlu0 %583
        %585 = vrot.lane.b32.xlu0 %v564, 24
        %v586 = vpop.permute.xlu0 %585
        %587 = vrot.lane.b32.xlu0 %v565, 24
        %v588 = vpop.permute.xlu0 %587
        %589 = vrot.lane.b32.xlu0 %v566, 24
        %v590 = vpop.permute.xlu0 %589
        %591 = vrot.lane.b32.xlu0 %v567, 24
        %v592 = vpop.permute.xlu0 %591
        %593 = vrot.lane.b32.xlu0 %v568, 24
        %v594 = vpop.permute.xlu0 %593
        %595 = vrot.lane.b32.xlu0 %v569, 24
        %v596 = vpop.permute.xlu0 %595
        %597 = vrot.lane.b32.xlu0 %v570, 24
        %v598 = vpop.permute.xlu0 %597
        %599 = vrot.lane.b32.xlu0 %v571, 24
        %v600 = vpop.permute.xlu0 %599
        %601 = vrot.lane.b32.xlu0 %v572, 24
        %v602 = vpop.permute.xlu0 %601
        %603 = vrot.lane.b32.xlu0 %v573, 24
        %v604 = vpop.permute.xlu0 %603
        %605 = vrot.lane.b32.xlu0 %v574, 24
        %v606 = vpop.permute.xlu0 %605
        %vm607 = vcmask 97280
        %v610 = vsel %vm607, %v367, %v464
        %v613 = vsel %vm607, %v368, %v466
        %v616 = vsel %vm607, %v369, %v468
        %v619 = vsel %vm607, %v370, %v470
        %v622 = vsel %vm607, %v371, %v472
        %v625 = vsel %vm607, %v372, %v474
        %v628 = vsel %vm607, %v373, %v476
        %v631 = vsel %vm607, %v374, %v478
        %v634 = vsel %vm607, %v375, %v480
        %v637 = vsel %vm607, %v376, %v482
        %v640 = vsel %vm607, %v377, %v484
        %v643 = vsel %vm607, %v378, %v486
        %v646 = vsel %vm607, %v379, %v488
        %v649 = vsel %vm607, %v380, %v490
        %v652 = vsel %vm607, %v381, %v492
        %v655 = vsel %vm607, %v382, %v494
        %vm656 = vcmask 195584
        %v658 = vsel %vm656, %v610, %v576
        %v660 = vsel %vm656, %v613, %v578
        %v662 = vsel %vm656, %v616, %v580
        %v664 = vsel %vm656, %v619, %v582
        %v666 = vsel %vm656, %v622, %v584
        %v668 = vsel %vm656, %v625, %v586
        %v670 = vsel %vm656, %v628, %v588
        %v672 = vsel %vm656, %v631, %v590
        %v674 = vsel %vm656, %v634, %v592
        %v676 = vsel %vm656, %v637, %v594
        %v678 = vsel %vm656, %v640, %v596
        %v680 = vsel %vm656, %v643, %v598
        %v682 = vsel %vm656, %v646, %v600
        %v684 = vsel %vm656, %v649, %v602
        %v686 = vsel %vm656, %v652, %v604
        %v688 = vsel %vm656, %v655, %v606
        %v689 = vld [vmem:[%s1] sm:$0xf]
        %v690 = vld [vmem:[%s1 + $0x4] sm:$0xf]
        %v691 = vld [vmem:[%s1 + $0x8] sm:$0xf]
        %v692 = vld [vmem:[%s1 + $0xc] sm:$0xf]
        %v693 = vld [vmem:[%s1 + $0x10] sm:$0x3]
        %v699 = vunpack.c.l.b16 %v689
        %v700 = vunpack.c.l.b16 %v690
        %v701 = vunpack.c.l.b16 %v691
        %v702 = vunpack.c.l.b16 %v692
        %v703 = vunpack.c.l.b16 %v693
        %v704 = vpack.c.b16 %v700, %v699
        %v705 = vpack.c.b16 %v702, %v701
        %v706 = vpack.c.b16 %v703, %v703
        %vm709 = vcmask 293888
        %v710 = vsel %vm709, %v658, 0
        %v712 = vsel %vm709, %v660, 0
        %v714 = vsel %vm709, %v662, 0
        %v716 = vsel %vm709, %v664, 0
        %v718 = vsel %vm709, %v666, 0
        %v720 = vsel %vm709, %v668, 0
        %v722 = vsel %vm709, %v670, 0
        %v724 = vsel %vm709, %v672, 0
        %v726 = vsel %vm709, %v674, 0
        %v728 = vsel %vm709, %v676, 0
        %v730 = vsel %vm709, %v678, 0
        %v732 = vsel %vm709, %v680, 0
        %v734 = vsel %vm709, %v682, 0
        %v736 = vsel %vm709, %v684, 0
        %v738 = vsel %vm709, %v686, 0
        %v740 = vsel %vm709, %v688, 0
        %vm742 = vcmask 1041408
        %v744 = vsel %vm742, %v706, 0
        %746 = vmatpush.bf16.msra.mxu0 0
        %747 = vmatpush.bf16.msra.mxu0 0
        %748 = vmatpush.bf16.msra.mxu0 0
        %749 = vmatpush.bf16.msra.mxu0 0
        %750 = vmatpush.bf16.msra.mxu0 0
        %751 = vmatpush.bf16.msra.mxu0 %v744
        %752 = vmatpush.bf16.msra.mxu0 %v705
        %753 = vmatpush.bf16.msra.mxu0 %v704
        %754 = vmatmul.bf16.gmra.mxu0 %v710
        %v755 = vpop.f32.mrf.mxu0
        %v756 = vadd.f32 0.0, %v755
        %v757 = vpop.f32.mrf.mxu0
        %v758 = vadd.f32 0.0, %v757
        %759 = vmatmul.bf16.gmra.mxu0 %v712
        %v760 = vpop.f32.mrf.mxu0
        %v761 = vadd.f32 0.0, %v760
        %v762 = vpop.f32.mrf.mxu0
        %v763 = vadd.f32 0.0, %v762
        %764 = vmatmul.bf16.gmra.mxu0 %v714
        %v765 = vpop.f32.mrf.mxu0
        %v766 = vadd.f32 0.0, %v765
        %v767 = vpop.f32.mrf.mxu0
        %v768 = vadd.f32 0.0, %v767
        %769 = vmatmul.bf16.gmra.mxu0 %v716
        %v770 = vpop.f32.mrf.mxu0
        %v771 = vadd.f32 0.0, %v770
        %v772 = vpop.f32.mrf.mxu0
        %v773 = vadd.f32 0.0, %v772
        %774 = vmatmul.bf16.gmra.mxu0 %v718
        %v775 = vpop.f32.mrf.mxu0
        %v776 = vadd.f32 0.0, %v775
        %v777 = vpop.f32.mrf.mxu0
        %v778 = vadd.f32 0.0, %v777
        %779 = vmatmul.bf16.gmra.mxu0 %v720
        %v780 = vpop.f32.mrf.mxu0
        %v781 = vadd.f32 0.0, %v780
        %v782 = vpop.f32.mrf.mxu0
        %v783 = vadd.f32 0.0, %v782
        %784 = vmatmul.bf16.gmra.mxu0 %v722
        %v785 = vpop.f32.mrf.mxu0
        %v786 = vadd.f32 0.0, %v785
        %v787 = vpop.f32.mrf.mxu0
        %v788 = vadd.f32 0.0, %v787
        %789 = vmatmul.bf16.gmra.mxu0 %v724
        %v790 = vpop.f32.mrf.mxu0
        %v791 = vadd.f32 0.0, %v790
        %v792 = vpop.f32.mrf.mxu0
        %v793 = vadd.f32 0.0, %v792
        %794 = vmatmul.bf16.gmra.mxu0 %v726
        %v795 = vpop.f32.mrf.mxu0
        %v796 = vadd.f32 0.0, %v795
        %v797 = vpop.f32.mrf.mxu0
        %v798 = vadd.f32 0.0, %v797
        %799 = vmatmul.bf16.gmra.mxu0 %v728
        %v800 = vpop.f32.mrf.mxu0
        %v801 = vadd.f32 0.0, %v800
        %v802 = vpop.f32.mrf.mxu0
        %v803 = vadd.f32 0.0, %v802
        %804 = vmatmul.bf16.gmra.mxu0 %v730
        %v805 = vpop.f32.mrf.mxu0
        %v806 = vadd.f32 0.0, %v805
        %v807 = vpop.f32.mrf.mxu0
        %v808 = vadd.f32 0.0, %v807
        %809 = vmatmul.bf16.gmra.mxu0 %v732
        %v810 = vpop.f32.mrf.mxu0
        %v811 = vadd.f32 0.0, %v810
        %v812 = vpop.f32.mrf.mxu0
        %v813 = vadd.f32 0.0, %v812
        %814 = vmatmul.bf16.gmra.mxu0 %v734
        %v815 = vpop.f32.mrf.mxu0
        %v816 = vadd.f32 0.0, %v815
        %v817 = vpop.f32.mrf.mxu0
        %v818 = vadd.f32 0.0, %v817
        %819 = vmatmul.bf16.gmra.mxu0 %v736
        %v820 = vpop.f32.mrf.mxu0
        %v821 = vadd.f32 0.0, %v820
        %v822 = vpop.f32.mrf.mxu0
        %v823 = vadd.f32 0.0, %v822
        %824 = vmatmul.bf16.gmra.mxu0 %v738
        %v825 = vpop.f32.mrf.mxu0
        %v826 = vadd.f32 0.0, %v825
        %v827 = vpop.f32.mrf.mxu0
        %v828 = vadd.f32 0.0, %v827
        %829 = vmatmul.bf16.gmra.mxu0 %v740
        %v830 = vpop.f32.mrf.mxu0
        %v831 = vadd.f32 0.0, %v830
        %v832 = vpop.f32.mrf.mxu0
        %v833 = vadd.f32 0.0, %v832
        %834 = vdwg.mxu0
        %v835 = vadd.f32 %v756, %v758
        %v836 = vadd.f32 %v835, %v761
        %v837 = vadd.f32 %v836, %v763
        %v838 = vadd.f32 %v837, %v766
        %v839 = vadd.f32 %v838, %v768
        %v840 = vadd.f32 %v839, %v771
        %v841 = vadd.f32 %v840, %v773
        %v842 = vadd.f32 %v841, %v776
        %v843 = vadd.f32 %v842, %v778
        %v844 = vadd.f32 %v843, %v781
        %v845 = vadd.f32 %v844, %v783
        %v846 = vadd.f32 %v845, %v786
        %v847 = vadd.f32 %v846, %v788
        %v848 = vadd.f32 %v847, %v791
        %v849 = vadd.f32 %v848, %v793
        %v850 = vadd.f32 %v849, %v796
        %v851 = vadd.f32 %v850, %v798
        %v852 = vadd.f32 %v851, %v801
        %v853 = vadd.f32 %v852, %v803
        %v854 = vadd.f32 %v853, %v806
        %v855 = vadd.f32 %v854, %v808
        %v856 = vadd.f32 %v855, %v811
        %v857 = vadd.f32 %v856, %v813
        %v858 = vadd.f32 %v857, %v816
        %v859 = vadd.f32 %v858, %v818
        %v860 = vadd.f32 %v859, %v821
        %v861 = vadd.f32 %v860, %v823
        %v862 = vadd.f32 %v861, %v826
        %v863 = vadd.f32 %v862, %v828
        %v864 = vadd.f32 %v863, %v831
        %v865 = vadd.f32 %v864, %v833
        %v866 = vrot.slane %v865, 4
        %v867 = vadd.f32 %v865, %v866
        %v868 = vrot.slane %v867, 2
        %v869 = vadd.f32 %v867, %v868
        %v870 = vrot.slane %v869, 1
        %v871 = vadd.f32 %v869, %v870
        %872 = vst [vmem:[%s182] sm:$0x1] %v871
        %v873 = vmul.f32 %v756, %v756
        %v874 = vmul.f32 %v758, %v758
        %v875 = vmul.f32 %v761, %v761
        %v876 = vmul.f32 %v763, %v763
        %v877 = vmul.f32 %v766, %v766
        %v878 = vmul.f32 %v768, %v768
        %v879 = vmul.f32 %v771, %v771
        %v880 = vmul.f32 %v773, %v773
        %v881 = vmul.f32 %v776, %v776
        %v882 = vmul.f32 %v778, %v778
        %v883 = vmul.f32 %v781, %v781
        %v884 = vmul.f32 %v783, %v783
        %v885 = vmul.f32 %v786, %v786
        %v886 = vmul.f32 %v788, %v788
        %v887 = vmul.f32 %v791, %v791
        %v888 = vmul.f32 %v793, %v793
        %v889 = vmul.f32 %v796, %v796
        %v890 = vmul.f32 %v798, %v798
        %v891 = vmul.f32 %v801, %v801
        %v892 = vmul.f32 %v803, %v803
        %v893 = vmul.f32 %v806, %v806
        %v894 = vmul.f32 %v808, %v808
        %v895 = vmul.f32 %v811, %v811
        %v896 = vmul.f32 %v813, %v813
        %v897 = vmul.f32 %v816, %v816
        %v898 = vmul.f32 %v818, %v818
        %v899 = vmul.f32 %v821, %v821
        %v900 = vmul.f32 %v823, %v823
        %v901 = vmul.f32 %v826, %v826
        %v902 = vmul.f32 %v828, %v828
        %v903 = vmul.f32 %v831, %v831
        %v904 = vmul.f32 %v833, %v833
        %v905 = vadd.f32 %v873, %v874
        %v906 = vadd.f32 %v905, %v875
        %v907 = vadd.f32 %v906, %v876
        %v908 = vadd.f32 %v907, %v877
        %v909 = vadd.f32 %v908, %v878
        %v910 = vadd.f32 %v909, %v879
        %v911 = vadd.f32 %v910, %v880
        %v912 = vadd.f32 %v911, %v881
        %v913 = vadd.f32 %v912, %v882
        %v914 = vadd.f32 %v913, %v883
        %v915 = vadd.f32 %v914, %v884
        %v916 = vadd.f32 %v915, %v885
        %v917 = vadd.f32 %v916, %v886
        %v918 = vadd.f32 %v917, %v887
        %v919 = vadd.f32 %v918, %v888
        %v920 = vadd.f32 %v919, %v889
        %v921 = vadd.f32 %v920, %v890
        %v922 = vadd.f32 %v921, %v891
        %v923 = vadd.f32 %v922, %v892
        %v924 = vadd.f32 %v923, %v893
        %v925 = vadd.f32 %v924, %v894
        %v926 = vadd.f32 %v925, %v895
        %v927 = vadd.f32 %v926, %v896
        %v928 = vadd.f32 %v927, %v897
        %v929 = vadd.f32 %v928, %v898
        %v930 = vadd.f32 %v929, %v899
        %v931 = vadd.f32 %v930, %v900
        %v932 = vadd.f32 %v931, %v901
        %v933 = vadd.f32 %v932, %v902
        %v934 = vadd.f32 %v933, %v903
        %v935 = vadd.f32 %v934, %v904
        %v936 = vrot.slane %v935, 4
        %v937 = vadd.f32 %v935, %v936
        %v938 = vrot.slane %v937, 2
        %v939 = vadd.f32 %v937, %v938
        %v940 = vrot.slane %v939, 1
        %v941 = vadd.f32 %v939, %v940
        %942 = vst [vmem:[%s188] sm:$0x1] %v941
        %s943 = sand.u32 %s90, 1
        %s944 = scalar_lea.sflag [#allocation3], %s943
        %s945 = sand.u32 %s90, 1
        %s946 = scalar_lea.vmem [#allocation2], %s945
        %s947 = sand.u32 %s118, 1
        %s948 = scalar_lea.sflag [#allocation5], %s947
        %s949 = sand.u32 %s118, 1
        %s950 = scalar_lea.vmem [#allocation4], %s949
        // Predicated region
        $region29: #{tpu_custom_call.1} parent=27 // pred_check
          %p951 = pneg %p100
        $region30: #{tpu_custom_call.1} parent=27 // pred_check_branch
          %953 = sbr.rel (%p951) target = $region32
        $region31: #{tpu_custom_call.1} parent=27 // pred_region
          %955 = vsyncadd %s944, 0
          %s956 = sadd.s32 %s26, %s25
          %s957 = scalar_lea.hbm %s2, %s956
          %s959 = sshll.u32 %s946, 4
          %s960 = int_to_ptr.vmem [resolvable:$true] %s959
          %s961 = sshll.u32 %s957, 4
          %s962 = int_to_ptr.hbm [resolvable:$true] %s961
          %964 = dma.vmem_to_hbm [thread:$0]  %s960, 16, %s962, %s944
        $region32: #{tpu_custom_call.1} parent=27 // pred_fallthru
          _
        // Predicated region
        $region33: #{tpu_custom_call.1} parent=27 // pred_check
          %p965 = pneg %p128
        $region34: #{tpu_custom_call.1} parent=27 // pred_check_branch
          %967 = sbr.rel (%p965) target = $region36
        $region35: #{tpu_custom_call.1} parent=27 // pred_region
          %969 = vsyncadd %s948, 0
          %s970 = sadd.s32 %s26, %s25
          %s971 = scalar_lea.hbm %s3, %s970
          %s973 = sshll.u32 %s950, 4
          %s974 = int_to_ptr.vmem [resolvable:$true] %s973
          %s975 = sshll.u32 %s971, 4
          %s976 = int_to_ptr.hbm [resolvable:$true] %s975
          %978 = dma.vmem_to_hbm [thread:$0]  %s974, 16, %s976, %s948
        $region36: #{tpu_custom_call.1} parent=27 // pred_fallthru
          _
      $region28: #{tpu_custom_call.1} parent=5 // pred_fallthru
        _
      %p979 = scmp.le.s32.totalorder 2, %s16
      // Predicated region
      $region37: #{tpu_custom_call.1} parent=5 // pred_check
        %p980 = pneg %p979
      $region38: #{tpu_custom_call.1} parent=5 // pred_check_branch
        %982 = sbr.rel (%p980) target = $region40
      $region39: #{tpu_custom_call.1} parent=5 // pred_region
        %s983 = ssub.s32 %s16, 2
        // Predicated region
        $region41: #{tpu_custom_call.1} parent=39 // pred_check
          %p984 = pneg %p106
        $region42: #{tpu_custom_call.1} parent=39 // pred_check_branch
          %986 = sbr.rel (%p984) target = $region44
        $region43: #{tpu_custom_call.1} parent=39 // pred_region
          %s987 = sand.u32 %s91, 1
          %s988 = scalar_lea.sflag [#allocation3], %s987
          %s989 = sand.u32 %s91, 1
          %s990 = scalar_lea.vmem [#allocation2], %s989
          %992 = dma.done %s988, 16
        $region44: #{tpu_custom_call.1} parent=39 // pred_fallthru
          _
        // Predicated region
        $region45: #{tpu_custom_call.1} parent=39 // pred_check
          %p993 = pneg %p134
        $region46: #{tpu_custom_call.1} parent=39 // pred_check_branch
          %995 = sbr.rel (%p993) target = $region48
        $region47: #{tpu_custom_call.1} parent=39 // pred_region
          %s996 = sand.u32 %s119, 1
          %s997 = scalar_lea.sflag [#allocation5], %s996
          %s998 = sand.u32 %s119, 1
          %s999 = scalar_lea.vmem [#allocation4], %s998
          %1001 = dma.done %s997, 16
        $region48: #{tpu_custom_call.1} parent=39 // pred_fallthru
          _
      $region40: #{tpu_custom_call.1} parent=5 // pred_fallthru
        _
    $region6: #{tpu_custom_call.1} parent=1 // loop_footer
      %s20 = sadd.s32 1, %s16
    $region7: #{tpu_custom_call.1} parent=1 // loop_footer_branch
      %15 = sbr.rel target = $region3
    $region8: #{tpu_custom_call.1} parent=1 // loop_exit
      _
    %1002 = vsyncpa [#allocation3], 1
    %s1003 = scalar_lea.sflag [#allocation3], 1
    %1004 = vsyncpa %s1003, 1
    %1005 = vsyncpa [#allocation5], 1
    %s1006 = scalar_lea.sflag [#allocation5], 1
    %1007 = vsyncpa %s1006, 1

</llo_original>
